<compile_context>
chip_gen: v5e
topology: v5e:2x2
jax: 0.10.0
libtpu: 0.0.40
codegen_flags: <defaults>
</compile_context>

<pallas_src>
import functools

import jax
import jax.numpy as jnp
from jax import lax
from jax.experimental import pallas as pl
from jax.experimental.pallas import tpu as pltpu


_INV_SQRT2 = 0.7071067811865476  # 1/sqrt(2), f32


def mlp_kernel(x_ref, w_ref, b_ref, o_ref, acc_ref):
    k = pl.program_id(2)

    @pl.when(k == 0)
    def _init():
        acc_ref[...] = jnp.zeros_like(acc_ref)

    # Inner loop is pure MXU: bf16 x bf16 -> f32 accumulation.
    acc_ref[...] += jnp.dot(
        x_ref[...], w_ref[...], preferred_element_type=jnp.float32
    )

    @pl.when(k == pl.num_programs(2) - 1)
    def _finalize():
        # Epilogue applied once per (i, j) output tile, all in f32.
        y = acc_ref[...] + b_ref[...]          # (tm, tn) + (1, tn) broadcast
        # nn.GELU() default = exact erf formulation.
        g = 0.5 * y * (1.0 + lax.erf(y * jnp.float32(_INV_SQRT2)))
        o_ref[...] = g.astype(o_ref.dtype)


def _round_up(v, m):
    return (v + m - 1) // m * m


def _pad2(a, m0, m1):
    p0 = (-a.shape[0]) % m0
    p1 = (-a.shape[1]) % m1
    if p0 or p1:
        a = jnp.pad(a, ((0, p0), (0, p1)))
    return a


@functools.partial(jax.jit, static_argnames=("tm_max", "tn_max", "tk_max"))
def mlp_forward(x, w, b, *, tm_max=256, tn_max=256, tk_max=512):
    """x: (B, n_in) f32, w: (n_in, n_out) f32, b: (n_out,) f32 -> (B, n_out) f32.

    Operands are cast to bf16 for the MXU; accumulation stays f32.
    Tile caps (256/256/512 bf16) keep double-buffered VMEM use ~1.5 MiB,
    well under the v7x 64 MiB / v6e 128 MiB budgets.
    """
    B, n_in = x.shape
    n_out = w.shape[1]

    # Tile sizes: lane-dense (multiples of 128) on N/K, sublane-aligned on M.
    tm = min(tm_max, _round_up(B, 8))
    tn = min(tn_max, _round_up(n_out, 128))
    tk = min(tk_max, _round_up(n_in, 128))

    # Pad to tile multiples (zero padding is exact for matmul; padded output
    # columns/rows are sliced off below, so GELU(0 + 0-bias) garbage never leaks).
    xp = _pad2(x.astype(jnp.bfloat16), tm, tk)
    wp = _pad2(w.astype(jnp.bfloat16), tk, tn)
    bp = _pad2(b.reshape(1, n_out).astype(jnp.float32), 1, tn)

    Mp, Kp = xp.shape
    Np = wp.shape[1]
    grid = (Mp // tm, Np // tn, Kp // tk)

    cost = pl.CostEstimate(
        flops=2 * Mp * Np * Kp,
        transcendentals=Mp * Np,
        bytes_accessed=xp.size * 2 + wp.size * 2 + bp.size * 4 + Mp * Np * 4,
    )

    out = pl.pallas_call(
        mlp_kernel,
        out_shape=jax.ShapeDtypeStruct((Mp, Np), x.dtype),
        grid_spec=pltpu.PrefetchScalarGridSpec(
            num_scalar_prefetch=0,
            grid=grid,
            in_specs=[
                pl.BlockSpec((tm, tk), lambda i, j, k: (i, k)),   # x tile
                pl.BlockSpec((tk, tn), lambda i, j, k: (k, j)),   # w tile
                pl.BlockSpec((1, tn), lambda i, j, k: (0, j)),    # bias row
            ],
            out_specs=pl.BlockSpec((tm, tn), lambda i, j, k: (i, j)),
            scratch_shapes=[pltpu.VMEM((tm, tn), jnp.float32)],   # f32 accumulator
        ),
        compiler_params=pltpu.CompilerParams(
            dimension_semantics=("parallel", "parallel", "arbitrary"),
            vmem_limit_bytes=32 * 1024 * 1024,
        ),
        cost_estimate=cost,
    )(xp, wp, bp)

    return out[:B, :n_out]


if __name__ == "__main__":
    key = jax.random.PRNGKey(0)
    k_x, k_w, k_b = jax.random.split(key, 3)

    # Small shapes consistent with the module's forward: (B, n_in) -> (B, n_out).
    B, n_in, n_out = 8, 32, 32
    x = jax.random.normal(k_x, (B, n_in), dtype=jnp.float32)
    # PyTorch nn.Linear shapes: W (n_out, n_in), b (n_out,)
    w_torch = jax.random.normal(k_w, (n_out, n_in), dtype=jnp.float32) * 0.1
    b = jax.random.normal(k_b, (n_out,), dtype=jnp.float32) * 0.1
    w = w_torch.T  # kernel layout (n_in, n_out)

    out = mlp_forward(x, w, b)
    jax.block_until_ready(out)

    # Reference with the same bf16-operand / f32-accumulate matmul + exact GELU.
    y_ref = jnp.dot(
        x.astype(jnp.bfloat16), w.astype(jnp.bfloat16),
        preferred_element_type=jnp.float32,
    ) + b[None, :]
    ref = jax.nn.gelu(y_ref, approximate=False)
    assert out.shape == (B, n_out)
    assert jnp.allclose(out, ref, atol=1e-4, rtol=1e-4), (
        float(jnp.max(jnp.abs(out - ref)))
    )

    print("KERNEL_OK")
</pallas_src>

<mosaic_0001>
module attributes {stable_mosaic.version = 11 : i64} {
  func.func @mlp_kernel(%arg0: i32, %arg1: i32, %arg2: i32, %arg3: memref<8x128xbf16, #tpu.memory_space<vmem>>, %arg4: memref<128x128xbf16, #tpu.memory_space<vmem>>, %arg5: memref<1x128xf32, #tpu.memory_space<vmem>>, %arg6: memref<8x128xf32, #tpu.memory_space<vmem>>, %arg7: memref<8x128xf32, #tpu.memory_space<vmem>>) attributes {dimension_semantics = [#tpu.dimension_semantics<parallel>, #tpu.dimension_semantics<parallel>, #tpu.dimension_semantics<arbitrary>], iteration_bounds = array<i64: 1, 1, 1>, scalar_prefetch = 0 : i64, scratch_operands = 1 : i64, tpu.core_type = #tpu.core_type<tc>, window_params = [{transform_indices = @transform_0, window_bounds = array<i64: 8, 128>}, {transform_indices = @transform_1, window_bounds = array<i64: 128, 128>}, {transform_indices = @transform_2, window_bounds = array<i64: 1, 128>}, {transform_indices = @transform_3, window_bounds = array<i64: 8, 128>}]} {
    %c0_i32 = arith.constant 0 : i32
    %0 = arith.cmpi eq, %arg2, %c0_i32 : i32
    %1 = arith.extui %0 : i1 to i32
    %c0_i32_0 = arith.constant 0 : i32
    %2 = arith.cmpi ne, %1, %c0_i32_0 : i32
    scf.if %2 {
      %cst_10 = arith.constant 0.000000e+00 : f32
      %12 = vector.broadcast %cst_10 : f32 to vector<8x128xf32>
      %c0_11 = arith.constant 0 : index
      %c0_12 = arith.constant 0 : index
      %13 = vector.load %arg7[%c0_11, %c0_12] : memref<8x128xf32, #tpu.memory_space<vmem>>, vector<8x128xf32>
      tpu.vector_store %arg7[%c0_11, %c0_12], %12 {strides = array<i32>} : memref<8x128xf32, #tpu.memory_space<vmem>>, vector<8x128xf32>,
    } else {
    }
    %c0 = arith.constant 0 : index
    %c0_1 = arith.constant 0 : index
    %3 = vector.load %arg7[%c0, %c0_1] : memref<8x128xf32, #tpu.memory_space<vmem>>, vector<8x128xf32>
    %c0_2 = arith.constant 0 : index
    %c0_3 = arith.constant 0 : index
    %4 = vector.load %arg3[%c0_2, %c0_3] : memref<8x128xbf16, #tpu.memory_space<vmem>>, vector<8x128xbf16>
    %c0_4 = arith.constant 0 : index
    %c0_5 = arith.constant 0 : index
    %5 = vector.load %arg4[%c0_4, %c0_5] : memref<128x128xbf16, #tpu.memory_space<vmem>>, vector<128x128xbf16>
    %cst = arith.constant dense<0.000000e+00> : vector<8x128xf32>
    %6 = tpu.matmul %4, %5, %cst {dimension_numbers = #tpu.dot_dimension_numbers<[1], [0], [0], [1], [0, 0, 1, 1], [], []>} : vector<8x128xbf16>, vector<128x128xbf16>, vector<8x128xf32> -> vector<8x128xf32>
    %7 = arith.addf %3, %6 : vector<8x128xf32>
    %c0_6 = arith.constant 0 : index
    %c0_7 = arith.constant 0 : index
    %8 = vector.load %arg7[%c0_6, %c0_7] : memref<8x128xf32, #tpu.memory_space<vmem>>, vector<8x128xf32>
    tpu.vector_store %arg7[%c0_6, %c0_7], %7 {strides = array<i32>} : memref<8x128xf32, #tpu.memory_space<vmem>>, vector<8x128xf32>,
    %c0_i32_8 = arith.constant 0 : i32
    %9 = arith.cmpi eq, %arg2, %c0_i32_8 : i32
    %10 = arith.extui %9 : i1 to i32
    %c0_i32_9 = arith.constant 0 : i32
    %11 = arith.cmpi ne, %10, %c0_i32_9 : i32
    scf.if %11 {
      %c0_10 = arith.constant 0 : index
      %c0_11 = arith.constant 0 : index
      %12 = vector.load %arg7[%c0_10, %c0_11] : memref<8x128xf32, #tpu.memory_space<vmem>>, vector<8x128xf32>
      %c0_12 = arith.constant 0 : index
      %c0_13 = arith.constant 0 : index
      %13 = vector.load %arg5[%c0_12, %c0_13] : memref<1x128xf32, #tpu.memory_space<vmem>>, vector<1x128xf32>
      %14 = vector.broadcast %13 : vector<1x128xf32> to vector<8x128xf32>
      %15 = arith.addf %12, %14 : vector<8x128xf32>
      %cst_14 = arith.constant 5.000000e-01 : f32
      %16 = vector.broadcast %cst_14 : f32 to vector<8x128xf32>
      %17 = arith.mulf %16, %15 : vector<8x128xf32>
      %cst_15 = arith.constant 0.707106769 : f32
      %18 = vector.broadcast %cst_15 : f32 to vector<8x128xf32>
      %19 = arith.mulf %15, %18 : vector<8x128xf32>
      %20 = math.erf %19 : vector<8x128xf32>
      %cst_16 = arith.constant 1.000000e+00 : f32
      %21 = vector.broadcast %cst_16 : f32 to vector<8x128xf32>
      %22 = arith.addf %21, %20 : vector<8x128xf32>
      %23 = arith.mulf %17, %22 : vector<8x128xf32>
      %c0_17 = arith.constant 0 : index
      %c0_18 = arith.constant 0 : index
      %24 = vector.load %arg6[%c0_17, %c0_18] : memref<8x128xf32, #tpu.memory_space<vmem>>, vector<8x128xf32>
      tpu.vector_store %arg6[%c0_17, %c0_18], %23 {strides = array<i32>} : memref<8x128xf32, #tpu.memory_space<vmem>>, vector<8x128xf32>,
    } else {
    }
    return
  }
  func.func @transform_0(%arg0: i32, %arg1: i32, %arg2: i32) -> (i32, i32) {
    %c0_i32 = arith.constant 0 : i32
    return %arg0, %arg2 : i32, i32
  }
  func.func @transform_1(%arg0: i32, %arg1: i32, %arg2: i32) -> (i32, i32) {
    %c0_i32 = arith.constant 0 : i32
    return %arg2, %arg1 : i32, i32
  }
  func.func @transform_2(%arg0: i32, %arg1: i32, %arg2: i32) -> (i32, i32) {
    %c0_i32 = arith.constant 0 : i32
    %c0_i32_0 = arith.constant 0 : i32
    return %c0_i32, %arg1 : i32, i32
  }
  func.func @transform_3(%arg0: i32, %arg1: i32, %arg2: i32) -> (i32, i32) {
    %c0_i32 = arith.constant 0 : i32
    return %arg0, %arg1 : i32, i32
  }
}

</mosaic_0001>

<llo_original>
// kernel: mlp_forward.1
$region0: #{mlp_forward.1}
  #allocation0 [shape = 'u32[]', space=smem, size = 0x4, offset = 0x4, fixed_abs, tag = 'smem constant byte address 0x4 - core index']
  #allocation1 [shape = 'u32[72,128]{1,0:T(1,128)}', space=vmem, size = 0x9000, scoped, tag = 'internal scratch']
  #allocation2 [shape = 'f32[8,128]{1,0:T(8,128)}', space=vmem, size = 0x1000, scoped, tag = 'scratch operand']
  %s0 = inlined_call_operand.vmem [shape: bf16[8,128], index: 0, kind: input, shape index: {}]
  %s1 = inlined_call_operand.vmem [shape: bf16[128,128], index: 1, kind: input, shape index: {}]
  %s2 = inlined_call_operand.vmem [shape: f32[1,128], index: 2, kind: input, shape index: {}]
  %s3 = inlined_call_operand.hbm [shape: f32[8,128], index: 3, kind: output, shape index: {}]
  %s4 = sld [smem:[#allocation0]]
  $region30: #{mlp_forward.1} parent=0
    _
  %s6 = ssub.s32 1, %s4
  %s7 = scalar_select 0, %s6, %s4
  $region1: #{mlp_forward.1} parent=0
    #allocation3 [shape = 'u8[4096]{0}', space=vmem, size = 0x1000, scoped, tag = 'output window, operand 0, single buffered']
    #allocation4 [shape = 's32[1]{0}', space=sflag, size = 0x4, scoped, tag = 'scoped memory for mlp_forward.1']
    %8 = vsyncpa [#allocation4], 0
    // Predicated region
    $region2: #{mlp_forward.1} parent=1 // pred_check
      _
    $region3: #{mlp_forward.1} parent=1 // pred_check_branch
      %10 = sbr.rel (0) target = $region5
    $region4: #{mlp_forward.1} parent=1 // pred_region
      _
    $region5: #{mlp_forward.1} parent=1 // pred_fallthru
      _
    // Predicated region
    $region6: #{mlp_forward.1} parent=1 // pred_check
      _
    $region7: #{mlp_forward.1} parent=1 // pred_check_branch
      %12 = sbr.rel (0) target = $region9
    $region8: #{mlp_forward.1} parent=1 // pred_region
      _
    $region9: #{mlp_forward.1} parent=1 // pred_fallthru
      _
    // Predicated region
    $region10: #{mlp_forward.1} parent=1 // pred_check
      _
    $region11: #{mlp_forward.1} parent=1 // pred_check_branch
      %14 = sbr.rel (0) target = $region13
    $region12: #{mlp_forward.1} parent=1 // pred_region
      _
    $region13: #{mlp_forward.1} parent=1 // pred_fallthru
      _
    %p15 = scmp.eq.s32.totalorder 0, 0
    // Predicated region
    $region14: #{mlp_forward.1} parent=1 // pred_check
      %p16 = pneg %p15
    $region15: #{mlp_forward.1} parent=1 // pred_check_branch
      %18 = sbr.rel (%p16) target = $region17
    $region16: #{mlp_forward.1} parent=1 // pred_region
      %19 = vst [vmem:[#allocation2] sm:$0xff] 0.0
    $region17: #{mlp_forward.1} parent=1 // pred_fallthru
      _
    %v20 = vld [vmem:[#allocation2] sm:$0xff]
    %v21 = vld [vmem:[%s0] sm:$0xf]
    %v22 = vld [vmem:[%s1] sm:$0xf]
    %v23 = vld [vmem:[%s1 + $0x4] sm:$0xf]
    %v24 = vld [vmem:[%s1 + $0x8] sm:$0xf]
    %v25 = vld [vmem:[%s1 + $0xc] sm:$0xf]
    %v26 = vld [vmem:[%s1 + $0x10] sm:$0xf]
    %v27 = vld [vmem:[%s1 + $0x14] sm:$0xf]
    %v28 = vld [vmem:[%s1 + $0x18] sm:$0xf]
    %v29 = vld [vmem:[%s1 + $0x1c] sm:$0xf]
    %v30 = vld [vmem:[%s1 + $0x20] sm:$0xf]
    %v31 = vld [vmem:[%s1 + $0x24] sm:$0xf]
    %v32 = vld [vmem:[%s1 + $0x28] sm:$0xf]
    %v33 = vld [vmem:[%s1 + $0x2c] sm:$0xf]
    %v34 = vld [vmem:[%s1 + $0x30] sm:$0xf]
    %v35 = vld [vmem:[%s1 + $0x34] sm:$0xf]
    %v36 = vld [vmem:[%s1 + $0x38] sm:$0xf]
    %v37 = vld [vmem:[%s1 + $0x3c] sm:$0xf]
    %v54 = vunpack.c.l.b16 %v22
    %v55 = vunpack.c.l.b16 %v23
    %v56 = vunpack.c.l.b16 %v24
    %v57 = vunpack.c.l.b16 %v25
    %v58 = vunpack.c.l.b16 %v26
    %v59 = vunpack.c.l.b16 %v27
    %v60 = vunpack.c.l.b16 %v28
    %v61 = vunpack.c.l.b16 %v29
    %v62 = vunpack.c.l.b16 %v30
    %v63 = vunpack.c.l.b16 %v31
    %v64 = vunpack.c.l.b16 %v32
    %v65 = vunpack.c.l.b16 %v33
    %v66 = vunpack.c.l.b16 %v34
    %v67 = vunpack.c.l.b16 %v35
    %v68 = vunpack.c.l.b16 %v36
    %v69 = vunpack.c.l.b16 %v37
    %v70 = vpack.c.b16 %v55, %v54
    %v71 = vpack.c.b16 %v57, %v56
    %v72 = vpack.c.b16 %v59, %v58
    %v73 = vpack.c.b16 %v61, %v60
    %v74 = vpack.c.b16 %v63, %v62
    %v75 = vpack.c.b16 %v65, %v64
    %v76 = vpack.c.b16 %v67, %v66
    %v77 = vpack.c.b16 %v69, %v68
    %86 = vmatpush.bf16.msra.mxu0 %v77
    %87 = vmatpush.bf16.msra.mxu0 %v76
    %88 = vmatpush.bf16.msra.mxu0 %v75
    %89 = vmatpush.bf16.msra.mxu0 %v74
    %90 = vmatpush.bf16.msra.mxu0 %v73
    %91 = vmatpush.bf16.msra.mxu0 %v72
    %92 = vmatpush.bf16.msra.mxu0 %v71
    %93 = vmatpush.bf16.msra.mxu0 %v70
    %94 = vmatmul.bf16.gmra.mxu0 %v21
    %v95 = vpop.f32.mrf.mxu0
    %v96 = vadd.f32 0.0, %v95
    %v97 = vpop.f32.mrf.mxu0
    %98 = vdwg.mxu0
    %v99 = vadd.f32 %v20, %v96
    %100 = vst [vmem:[#allocation2] sm:$0xff] %v99
    // Predicated region
    $region18: #{mlp_forward.1} parent=1 // pred_check
      %p101 = pneg %p15
    $region19: #{mlp_forward.1} parent=1 // pred_check_branch
      %103 = sbr.rel (%p101) target = $region21
    $region20: #{mlp_forward.1} parent=1 // pred_region
      %v104 = vld [vmem:[#allocation2] sm:$0xff]
      %v105 = vld [vmem:[%s2] sm:$0x1]
      %v107 = vperm.slane %v105, 0
      %v109 = vadd.f32 %v104, %v107
      %v110 = vmul.f32 %v109, 0.5
      %v111 = vmul.f32 %v109, 0.70710677
      %v112 = vmul.f32 %v111, %v111
      %v113 = vmin.f32 16.0, %v112
      %v114 = vmul.f32 %v113, 2.1237322e-06
      %v115 = vadd.f32 %v114, 0.00028619796
      %v116 = vmul.f32 %v113, %v115
      %v117 = vadd.f32 %v116, 0.0036580483
      %v118 = vmul.f32 %v113, %v117
      %v119 = vadd.f32 %v118, 0.05243302
      %v120 = vmul.f32 %v113, %v119
      %v121 = vadd.f32 %v120, 0.18741608
      %v122 = vmul.f32 %v113, %v121
      %v123 = vadd.f32 %v122, 1.1283791
      %v124 = vmul.f32 %v111, %v123
      %v125 = vmul.f32 %v113, 3.8918573e-05
      %v126 = vadd.f32 %v125, 0.001143296
      %v127 = vmul.f32 %v113, %v126
      %v128 = vadd.f32 %v127, 0.014752088
      %v129 = vmul.f32 %v113, %v128
      %v130 = vadd.f32 %v129, 0.112945676
      %v131 = vmul.f32 %v113, %v130
      %v132 = vadd.f32 %v131, 0.4994258
      %v133 = vmul.f32 %v113, %v132
      %v134 = vadd.f32 %v133, 1.0
      %v135 = vrcp.pop %v134
      %v136 = vmul.f32 %v134, %v135
      %v137 = vsub.f32 1.0, %v136
      %v138 = vmul.f32 %v135, %v137
      %v139 = vadd.f32 %v135, %v138
      %vm140 = vweird.f32 %v134
      %vm141 = vweird.f32 %v135
      %vm142 = vmor %vm140, %vm141
      %v143 = vsel %vm142, %v135, %v139
      %v144 = vand.u32 2147483647, %v134
      %vm145 = vcmp.eq.f32.partialorder %v144, 8.507059e+37
      %v146 = vand.u32 %v134, 2147483648
      %v147 = vor.u32 1.1754944e-38, %v146
      %v148 = vsel %vm145, %v147, %v143
      %v149 = vmul.f32 %v124, %v148
      %v150 = vmin.f32 %v149, 1.0
      %v151 = vmax.f32 %v150, -1.0
      %v152 = vadd.f32 %v151, 1.0
      %v153 = vmul.f32 %v110, %v152
      %154 = vst [vmem:[#allocation3] sm:$0xff] %v153
    $region21: #{mlp_forward.1} parent=1 // pred_fallthru
      _
    // Predicated region
    $region22: #{mlp_forward.1} parent=1 // pred_check
      _
    $region23: #{mlp_forward.1} parent=1 // pred_check_branch
      %156 = sbr.rel (0) target = $region25
    $region24: #{mlp_forward.1} parent=1 // pred_region
      %158 = vsyncadd [#allocation4], 0
      %s160 = sshll.u32 [#allocation3], 4
      %s161 = int_to_ptr.vmem [resolvable:$true] %s160
      %s162 = sshll.u32 %s3, 4
      %s163 = int_to_ptr.hbm [resolvable:$true] %s162
      %165 = dma.vmem_to_hbm [thread:$0]  %s161, 128, %s163, [#allocation4]
    $region25: #{mlp_forward.1} parent=1 // pred_fallthru
      _
    // Predicated region
    $region26: #{mlp_forward.1} parent=1 // pred_check
      _
    $region27: #{mlp_forward.1} parent=1 // pred_check_branch
      %167 = sbr.rel (0) target = $region29
    $region28: #{mlp_forward.1} parent=1 // pred_region
      %169 = dma.done [#allocation4], 128
    $region29: #{mlp_forward.1} parent=1 // pred_fallthru
      _
    %170 = vsyncpa [#allocation4], 1

</llo_original>
